<compile_context>
chip_gen: v7x
topology: tpu7x:2x2x1
jax: 0.10.0
libtpu: 0.0.40
codegen_flags: <defaults>
</compile_context>

<pallas_src>
import functools
from itertools import permutations

import jax
import jax.numpy as jnp
from jax.experimental import pallas as pl
from jax.experimental.pallas import tpu as pltpu

AMPERE_M = 4
AMPERE_N = 2
SPARSE_PATTERNS_COUNT = 6


def build_ampere_pattern_list():
    # PyTorch builds list(set(permutations([1,1,0,0]))) whose ordering is
    # hash/insertion dependent; here we deduplicate deterministically (first
    # occurrence).  NOTE: when loading trained PyTorch mask_scores, the
    # channel-to-pattern order must be matched to the checkpoint.
    base = (1.0,) * AMPERE_N + (0.0,) * (AMPERE_M - AMPERE_N)
    seen, pats = set(), []
    for p in permutations(base):
        if p not in seen:
            seen.add(p)
            pats.append(p)
    assert len(pats) == SPARSE_PATTERNS_COUNT
    return pats


AMPERE_PATTERN_LIST = build_ampere_pattern_list()
# For output slot k (0..3): which of the 6 patterns carry a 1 there (3 each).
PATTERN_COLS = tuple(
    tuple(p for p in range(SPARSE_PATTERNS_COUNT)
          if AMPERE_PATTERN_LIST[p][k] == 1.0)
    for k in range(AMPERE_M))
assert all(len(c) == 3 for c in PATTERN_COLS)


def build_ampere_pattern():
    return jnp.asarray(AMPERE_PATTERN_LIST, dtype=jnp.float32)  # (6, 4)


# ---------------------------------------------------------------------------
# Tiling / VMEM helpers
# ---------------------------------------------------------------------------
def _fit_tile(dim, preferred, quantum):
    """Full dim if it fits, else the largest multiple of `quantum` <= preferred."""
    if dim <= preferred:
        return dim
    return max(quantum, (preferred // quantum) * quantum)


def _maybe_split_rows(rows, tile_rows, cols, tile_cols, quantum=8,
                      min_elems=1 << 17):
    """Keep >= 2 grid blocks along a 'parallel' axis for medium+ problems so
    both v7x TensorCores get work (v5e/v6e are single-TC; the extra ~0.35us
    grid step is skipped for tiny problems)."""
    if pl.cdiv(rows, tile_rows) * pl.cdiv(cols, tile_cols) > 1:
        return tile_rows
    if rows * cols < min_elems or rows < 2 * quantum:
        return tile_rows
    half = (rows + 1) // 2
    return min(((half + quantum - 1) // quantum) * quantum, tile_rows)


def _vmem_limit_bytes(*buffer_bytes, headroom=1.25, floor=16 << 20,
                      cap=40 << 20):
    """Scoped-VMEM limit derived from the actual double-buffered tile bytes.
    Capped at 40 MiB to leave headroom on v7x's 64 MiB physical VMEM (well
    under v5e/v6e's 128 MiB)."""
    need = int(sum(buffer_bytes) * 2 * headroom)  # x2: double buffering
    return int(max(floor, min(cap, need)))


@functools.lru_cache(maxsize=None)
def _roll_shift_moves_to_higher_lane():
    """Probe the pltpu.roll convention once: does pltpu.roll(x, s, axis) send
    element i to lane i+s (np.roll convention) or to lane i-s?  The result
    selects which compile-time (lane & 3) neighbour masks pair with which
    rolled value in the threshold kernel."""
    def probe(o_ref):
        lane = jax.lax.broadcasted_iota(jnp.float32, o_ref.shape, 1)
        o_ref[...] = pltpu.roll(lane, 1, 1)

    out = pl.pallas_call(
        probe, out_shape=jax.ShapeDtypeStruct((8, 128), jnp.float32))()
    return bool(out[0, 1] == 0.0)


# ---------------------------------------------------------------------------
# Kernels
# ---------------------------------------------------------------------------
def _annealing_kernel(temp_ref, scores_ref, out_ref, *, training):
    """scores_ref: (6, tg, ti) channel planes; out_ref: (tg, 4, ti)."""
    planes = [scores_ref[p].astype(jnp.float32)
              for p in range(SPARSE_PATTERNS_COUNT)]            # each (tg, ti)

    if training:
        t = temp_ref[0]
        z = [p_ * t for p_ in planes]
        m = z[0]
        for zp in z[1:]:
            m = jnp.maximum(m, zp)                              # stable softmax
        e = [jnp.exp(zp - m) for zp in z]
        denom = e[0]
        for ep in e[1:]:
            denom = denom + ep
        inv = pl.reciprocal(denom)          # exact; kernel is HBM-bound
        w = [ep * inv for ep in e]
    else:
        # first-maximal-index one-hot (matches torch.argmax / jnp.argmax)
        m = planes[0]
        for p_ in planes[1:]:
            m = jnp.maximum(m, p_)
        w, found = [], None
        for p_ in planes:
            eq = p_ == m
            if found is None:
                sel, found = eq, eq
            else:
                sel = jnp.logical_and(eq, jnp.logical_not(found))
                found = jnp.logical_or(found, eq)
            w.append(sel.astype(jnp.float32))

    # (softmax/one-hot) @ ampere_pattern done as 8 VPU adds (pattern is 0/1
    # with exactly three 1s per output slot) -- no MXU involved.
    col = [w[a] + w[b] + w[c] for (a, b, c) in PATTERN_COLS]    # each (tg, ti)

    # Lean nested select chain into the (tg, 4, ti) block (guaranteed
    # lowering).  TODO(synk): switch to direct out_ref[:, k, :] slot stores
    # once the sublane-offset store relayout is reliably supported.
    kidx = jax.lax.broadcasted_iota(jnp.int32, out_ref.shape, dimension=1)
    res = jnp.where(
        kidx == 0, col[0][:, None, :],
        jnp.where(kidx == 1, col[1][:, None, :],
                  jnp.where(kidx == 2, col[2][:, None, :],
                            col[3][:, None, :])))
    out_ref[...] = res.astype(out_ref.dtype)


def _sig_thresh_kernel(thr_ref, scores_ref, out_ref, *, training, roll_up):
    """scores_ref / out_ref: (tr, tc) lane-dense; Ampere groups = 4 adjacent
    lanes.  `roll_up` is the probed roll convention (True: element i lands at
    lane i+shift, i.e. np.roll semantics)."""
    x = scores_ref[...].astype(jnp.float32)
    _, cols = x.shape                                           # tc % 4 == 0
    lane3 = jax.lax.broadcasted_iota(jnp.int32, x.shape, dimension=1) & 3

    # Count, for each element, how many same-group members beat it.
    # Neighbour `d` lanes to the LEFT (lower index): in-group iff
    # (lane & 3) >= d, and it wins ties (torch.topk keeps the lower index) so
    # the compare is >=.  Neighbour `d` lanes to the RIGHT: in-group iff
    # (lane & 3) < 4 - d, compare is strict >.  Wrap-around lanes are
    # automatically excluded by the same masks, so only the 6 value rolls
    # remain on the XLU -- no iota rolls, no iota compares per shift.
    cnt = jnp.zeros(x.shape, jnp.int32)
    for d in (1, 2, 3):
        for shift, is_left in ((d, roll_up), (cols - d, not roll_up)):
            rx = pltpu.roll(x, shift, 1)
            if is_left:
                hit = (lane3 >= d) & (rx >= x)
            else:
                hit = (lane3 < AMPERE_M - d) & (rx > x)
            cnt = cnt + hit.astype(jnp.int32)
    top = (cnt < AMPERE_N).astype(jnp.float32)                  # 2-of-4 mask

    if training:
        # Sigmoid already folded into the threshold host-side.
        # TODO(synk): ThresholdBinarizer's kthvalue "keep at least nb_min"
        # fallback (data-dependent global kth-value) is omitted here.
        m = (x > thr_ref[0]).astype(jnp.float32)
        top = jnp.maximum(m, top)
    out_ref[...] = top.astype(out_ref.dtype)


# ---------------------------------------------------------------------------
# Wrappers
# ---------------------------------------------------------------------------
def annealing_scores_to_kernel_layout(mask_scores):
    """(in, G, 6) PyTorch parameter layout -> (6, G, in) lane-dense channel
    planes.  Do this ONCE (at parameter load / module construction), not per
    forward.  TODO(synk): store the parameter in this layout in a real
    integration (or fuse the relayout into the optimizer update)."""
    return jnp.transpose(mask_scores, (2, 1, 0))


def annealing_mask(mask_scores_t, ampere_temperature, training,
                   out_dtype=jnp.float32):
    """mask_scores_t: (6, G, in) channel-plane layout.  Returns (4*G, in)."""
    npat, groups, in_f = mask_scores_t.shape
    assert npat == SPARSE_PATTERNS_COUNT
    tg = _fit_tile(groups, 128, 8)
    ti = _fit_tile(in_f, 2048, 128)
    tg = _maybe_split_rows(groups, tg, in_f, ti, quantum=8)
    grid = (pl.cdiv(groups, tg), pl.cdiv(in_f, ti))
    temp = jnp.asarray([ampere_temperature], dtype=jnp.float32)

    in_bytes = SPARSE_PATTERNS_COUNT * tg * ti * mask_scores_t.dtype.itemsize
    # (tg, 4, ti) output block: the sublane dim pads 4 -> 8 in VMEM.
    out_bytes = tg * 8 * ti * jnp.dtype(out_dtype).itemsize

    out3 = pl.pallas_call(
        functools.partial(_annealing_kernel, training=training),
        out_shape=jax.ShapeDtypeStruct((groups, AMPERE_M, in_f), out_dtype),
        grid=grid,
        in_specs=[
            pl.BlockSpec(memory_space=pltpu.MemorySpace.SMEM),      # temperature
            pl.BlockSpec((SPARSE_PATTERNS_COUNT, tg, ti),
                         lambda g, i: (0, g, i)),
        ],
        out_specs=pl.BlockSpec((tg, AMPERE_M, ti), lambda g, i: (g, 0, i)),
        compiler_params=pltpu.CompilerParams(
            dimension_semantics=("parallel", "parallel"),
            vmem_limit_bytes=_vmem_limit_bytes(in_bytes, out_bytes)),
    )(temp, mask_scores_t)

    # (G, 4, in) -> (out, in): row 4*g + k is contiguous => free reshape
    # (replaces the PyTorch `s.view(-1, G*4).t()` HBM transpose).
    return out3.reshape(groups * AMPERE_M, in_f)


def sigmoied_threshold_mask(mask_scores, threshold, use_sigmoid, training,
                            out_dtype=jnp.float32):
    out_f, in_f = mask_scores.shape
    assert in_f % AMPERE_M == 0
    tr = _fit_tile(out_f, 512, 8)
    tc = _fit_tile(in_f, 2048, 128)
    tr = _maybe_split_rows(out_f, tr, in_f, tc, quantum=8)
    grid = (pl.cdiv(out_f, tr), pl.cdiv(in_f, tc))

    # Fold the sigmoid into the threshold: sigmoid(x) > t  <=>  x > logit(t)
    # (strictly monotonic).  Elements exactly on the boundary may flip by
    # 1 ulp; thresholds outside (0,1) are clipped (degenerate in PyTorch too).
    if training and use_sigmoid:
        t = jnp.clip(jnp.asarray(threshold, jnp.float32), 1e-7, 1.0 - 1e-7)
        thr_val = jnp.log(t) - jnp.log1p(-t)
    else:
        thr_val = jnp.asarray(threshold, jnp.float32)
    thr = jnp.asarray(thr_val, dtype=jnp.float32).reshape(1)

    io_bytes = (tr * tc * mask_scores.dtype.itemsize +
                tr * tc * jnp.dtype(out_dtype).itemsize)

    return pl.pallas_call(
        functools.partial(_sig_thresh_kernel, training=training,
                          roll_up=_roll_shift_moves_to_higher_lane()),
        out_shape=jax.ShapeDtypeStruct((out_f, in_f), out_dtype),
        grid=grid,
        in_specs=[
            pl.BlockSpec(memory_space=pltpu.MemorySpace.SMEM),      # threshold
            pl.BlockSpec((tr, tc), lambda r, c: (r, c)),
        ],
        out_specs=pl.BlockSpec((tr, tc), lambda r, c: (r, c)),
        compiler_params=pltpu.CompilerParams(
            dimension_semantics=("parallel", "parallel"),
            vmem_limit_bytes=_vmem_limit_bytes(io_bytes)),
    )(thr, mask_scores)


class AmpereMaskModulePallas:
    """JAX/Pallas port of AmpereMaskModule.forward.

    For the 'annealing' method the (in, G, 6) mask_scores parameter is
    relayouted ONCE here to (6, G, in) channel planes so each forward is a
    single lane-dense HBM pass (no per-call transpose)."""

    def __init__(self, method, mask_scores, training=True, out_dtype=jnp.float32):
        assert method in ("threshold", "sigmoied_threshold", "annealing", "topK")
        self.method = method
        self.training = training
        self.out_dtype = out_dtype
        self.ampere_pattern = build_ampere_pattern()
        if method == "annealing":
            # TODO(synk): remap the 6 pattern planes when importing PyTorch
            # checkpoints (torch's list(set(permutations(...))) order is hash
            # dependent) and store the parameter pre-transposed.
            self.mask_scores = annealing_scores_to_kernel_layout(mask_scores)
        else:
            self.mask_scores = mask_scores

    def __call__(self, ampere_temperature):
        if self.method in ("threshold", "sigmoied_threshold"):
            return sigmoied_threshold_mask(
                self.mask_scores, ampere_temperature,
                "sigmoied" in self.method, self.training, self.out_dtype)
        elif self.method == "annealing":
            return annealing_mask(self.mask_scores, ampere_temperature,
                                  self.training, self.out_dtype)
        else:
            # TODO(synk): 'topK' uses a global TopKBinarizer (global quantile
            # over all scores); not implemented as a Pallas kernel.
            raise NotImplementedError("topK method not implemented")


# ---------------------------------------------------------------------------
# Pure-JAX references (for correctness checking only)
# ---------------------------------------------------------------------------
def _ref_annealing(scores, pattern, temp, training):
    if training:
        s = jax.nn.softmax(scores * temp, axis=-1)
    else:
        idx = jnp.argmax(scores, axis=-1)
        s = jax.nn.one_hot(idx, scores.shape[-1], dtype=jnp.float32)
    s = s @ pattern
    s = s.reshape(-1, s.shape[1] * s.shape[2])
    return s.T


def _ref_get_final_mask(scores, n=AMPERE_N, m=AMPERE_M):
    o, i = scores.shape
    g = scores.reshape(o, i // m, m)
    _, idx = jax.lax.top_k(g, n)
    oh = jax.nn.one_hot(idx, m, dtype=scores.dtype).sum(axis=-2)
    return oh.reshape(o, i)


def _ref_sig_thresh(scores, threshold, use_sigmoid, training):
    top = _ref_get_final_mask(scores)
    if training:
        g = jax.nn.sigmoid(scores) if use_sigmoid else scores
        m = (g > threshold).astype(jnp.float32)
        return jnp.maximum(m, top)
    return top


if __name__ == "__main__":
    key = jax.random.PRNGKey(0)
    k1, k2 = jax.random.split(key)

    # linear weight shape the pruning context wraps: (out_features, in_features)
    out_features, in_features = 32, 128
    temperature = 7.5

    # ---- annealing method ---------------------------------------------------
    ann_scores = jax.random.normal(
        k1, (in_features, out_features // AMPERE_M, SPARSE_PATTERNS_COUNT),
        dtype=jnp.float32) * 0.5
    mod_ann = AmpereMaskModulePallas("annealing", ann_scores, training=True)
    ann_train = jax.block_until_ready(mod_ann(temperature))
    mod_ann.training = False
    ann_eval = jax.block_until_ready(mod_ann(temperature))

    pattern = mod_ann.ampere_pattern
    ref_train = _ref_annealing(ann_scores, pattern, temperature, True)
    ref_eval = _ref_annealing(ann_scores, pattern, temperature, False)
    assert ann_train.shape == (out_features, in_features)
    assert jnp.allclose(ann_train, ref_train, atol=1e-5), "annealing train mismatch"
    assert jnp.allclose(ann_eval, ref_eval, atol=1e-6), "annealing eval mismatch"

    # ---- sigmoied_threshold method ------------------------------------------
    thr_scores = jax.random.normal(
        k2, (out_features, in_features), dtype=jnp.float32)
    mod_thr = AmpereMaskModulePallas("sigmoied_threshold", thr_scores,
                                     training=True)
    thr_train = jax.block_until_ready(mod_thr(0.6))
    mod_thr.training = False
    thr_eval = jax.block_until_ready(mod_thr(0.6))

    ref_thr_train = _ref_sig_thresh(thr_scores, 0.6, True, True)
    ref_thr_eval = _ref_sig_thresh(thr_scores, 0.6, True, False)
    assert thr_train.shape == (out_features, in_features)
    assert jnp.allclose(thr_train, ref_thr_train, atol=1e-6), "threshold train mismatch"
    assert jnp.allclose(thr_eval, ref_thr_eval, atol=1e-6), "threshold eval mismatch"

    # ---- tie-break check (constant init is the PyTorch default) -------------
    tie_scores = jnp.zeros((8, 16), dtype=jnp.float32)
    tie_mask = jax.block_until_ready(
        sigmoied_threshold_mask(tie_scores, 0.5, True, False))
    assert jnp.array_equal(tie_mask, _ref_get_final_mask(tie_scores)), \
        "tie-break mismatch"

    # ---- optional bf16 mask output (lossless for exact 0/1 masks) ------------
    thr_eval_bf16 = jax.block_until_ready(
        sigmoied_threshold_mask(thr_scores, 0.6, True, False,
                                out_dtype=jnp.bfloat16))
    assert bool(jnp.array_equal(thr_eval_bf16.astype(jnp.float32),
                                ref_thr_eval)), "bf16 threshold eval mismatch"

    print("KERNEL_OK")
</pallas_src>

<mosaic_0001>
module attributes {stable_mosaic.version = 11 : i64} {
  func.func @_annealing_kernel(%arg0: i32, %arg1: i32, %arg2: memref<1xf32, #tpu.memory_space<smem>>, %arg3: memref<6x8x128xf32, #tpu.memory_space<vmem>>, %arg4: memref<8x4x128xf32, #tpu.memory_space<vmem>>) attributes {dimension_semantics = [#tpu.dimension_semantics<parallel>, #tpu.dimension_semantics<parallel>], iteration_bounds = array<i64: 1, 1>, scalar_prefetch = 0 : i64, scratch_operands = 0 : i64, tpu.core_type = #tpu.core_type<tc>, window_params = [{transform_indices = @transform_0, window_bounds = array<i64: 1>}, {transform_indices = @transform_1, window_bounds = array<i64: 6, 8, 128>}, {transform_indices = @transform_2, window_bounds = array<i64: 8, 4, 128>}]} {
    %c0 = arith.constant 0 : index
    %c0_0 = arith.constant 0 : index
    %c0_1 = arith.constant 0 : index
    %0 = vector.load %arg3[%c0, %c0_0, %c0_1] : memref<6x8x128xf32, #tpu.memory_space<vmem>>, vector<1x8x128xf32>
    %1 = vector.shape_cast %0 : vector<1x8x128xf32> to vector<8x128xf32>
    %c1 = arith.constant 1 : index
    %c0_2 = arith.constant 0 : index
    %c0_3 = arith.constant 0 : index
    %2 = vector.load %arg3[%c1, %c0_2, %c0_3] : memref<6x8x128xf32, #tpu.memory_space<vmem>>, vector<1x8x128xf32>
    %3 = vector.shape_cast %2 : vector<1x8x128xf32> to vector<8x128xf32>
    %c2 = arith.constant 2 : index
    %c0_4 = arith.constant 0 : index
    %c0_5 = arith.constant 0 : index
    %4 = vector.load %arg3[%c2, %c0_4, %c0_5] : memref<6x8x128xf32, #tpu.memory_space<vmem>>, vector<1x8x128xf32>
    %5 = vector.shape_cast %4 : vector<1x8x128xf32> to vector<8x128xf32>
    %c3 = arith.constant 3 : index
    %c0_6 = arith.constant 0 : index
    %c0_7 = arith.constant 0 : index
    %6 = vector.load %arg3[%c3, %c0_6, %c0_7] : memref<6x8x128xf32, #tpu.memory_space<vmem>>, vector<1x8x128xf32>
    %7 = vector.shape_cast %6 : vector<1x8x128xf32> to vector<8x128xf32>
    %c4 = arith.constant 4 : index
    %c0_8 = arith.constant 0 : index
    %c0_9 = arith.constant 0 : index
    %8 = vector.load %arg3[%c4, %c0_8, %c0_9] : memref<6x8x128xf32, #tpu.memory_space<vmem>>, vector<1x8x128xf32>
    %9 = vector.shape_cast %8 : vector<1x8x128xf32> to vector<8x128xf32>
    %c5 = arith.constant 5 : index
    %c0_10 = arith.constant 0 : index
    %c0_11 = arith.constant 0 : index
    %10 = vector.load %arg3[%c5, %c0_10, %c0_11] : memref<6x8x128xf32, #tpu.memory_space<vmem>>, vector<1x8x128xf32>
    %11 = vector.shape_cast %10 : vector<1x8x128xf32> to vector<8x128xf32>
    %c0_12 = arith.constant 0 : index
    %12 = memref.load %arg2[%c0_12] : memref<1xf32, #tpu.memory_space<smem>>
    %13 = vector.broadcast %12 : f32 to vector<8x128xf32>
    %14 = arith.mulf %1, %13 : vector<8x128xf32>
    %15 = vector.broadcast %12 : f32 to vector<8x128xf32>
    %16 = arith.mulf %3, %15 : vector<8x128xf32>
    %17 = vector.broadcast %12 : f32 to vector<8x128xf32>
    %18 = arith.mulf %5, %17 : vector<8x128xf32>
    %19 = vector.broadcast %12 : f32 to vector<8x128xf32>
    %20 = arith.mulf %7, %19 : vector<8x128xf32>
    %21 = vector.broadcast %12 : f32 to vector<8x128xf32>
    %22 = arith.mulf %9, %21 : vector<8x128xf32>
    %23 = vector.broadcast %12 : f32 to vector<8x128xf32>
    %24 = arith.mulf %11, %23 : vector<8x128xf32>
    %25 = arith.maximumf %14, %16 : vector<8x128xf32>
    %26 = arith.maximumf %25, %18 : vector<8x128xf32>
    %27 = arith.maximumf %26, %20 : vector<8x128xf32>
    %28 = arith.maximumf %27, %22 : vector<8x128xf32>
    %29 = arith.maximumf %28, %24 : vector<8x128xf32>
    %30 = arith.subf %14, %29 : vector<8x128xf32>
    %31 = math.exp %30 : vector<8x128xf32>
    %32 = arith.subf %16, %29 : vector<8x128xf32>
    %33 = math.exp %32 : vector<8x128xf32>
    %34 = arith.subf %18, %29 : vector<8x128xf32>
    %35 = math.exp %34 : vector<8x128xf32>
    %36 = arith.subf %20, %29 : vector<8x128xf32>
    %37 = math.exp %36 : vector<8x128xf32>
    %38 = arith.subf %22, %29 : vector<8x128xf32>
    %39 = math.exp %38 : vector<8x128xf32>
    %40 = arith.subf %24, %29 : vector<8x128xf32>
    %41 = math.exp %40 : vector<8x128xf32>
    %42 = arith.addf %31, %33 : vector<8x128xf32>
    %43 = arith.addf %42, %35 : vector<8x128xf32>
    %44 = arith.addf %43, %37 : vector<8x128xf32>
    %45 = arith.addf %44, %39 : vector<8x128xf32>
    %46 = arith.addf %45, %41 : vector<8x128xf32>
    %47 = tpu.reciprocal %46 : vector<8x128xf32> -> vector<8x128xf32>
    %48 = arith.mulf %31, %47 : vector<8x128xf32>
    %49 = arith.mulf %33, %47 : vector<8x128xf32>
    %50 = arith.mulf %35, %47 : vector<8x128xf32>
    %51 = arith.mulf %37, %47 : vector<8x128xf32>
    %52 = arith.mulf %39, %47 : vector<8x128xf32>
    %53 = arith.mulf %41, %47 : vector<8x128xf32>
    %54 = arith.addf %48, %49 : vector<8x128xf32>
    %55 = arith.addf %54, %50 : vector<8x128xf32>
    %56 = arith.addf %48, %51 : vector<8x128xf32>
    %57 = arith.addf %56, %52 : vector<8x128xf32>
    %58 = arith.addf %49, %51 : vector<8x128xf32>
    %59 = arith.addf %58, %53 : vector<8x128xf32>
    %60 = arith.addf %50, %52 : vector<8x128xf32>
    %61 = arith.addf %60, %53 : vector<8x128xf32>
    %62 = tpu.iota {dimensions = array<i32: 1>} : vector<8x4x128xi32>
    %c0_i32 = arith.constant 0 : i32
    %63 = vector.broadcast %c0_i32 : i32 to vector<8x4x128xi32>
    %64 = arith.cmpi eq, %62, %63 : vector<8x4x128xi32>
    %65 = vector.shape_cast %55 : vector<8x128xf32> to vector<8x1x128xf32>
    %c1_i32 = arith.constant 1 : i32
    %66 = vector.broadcast %c1_i32 : i32 to vector<8x4x128xi32>
    %67 = arith.cmpi eq, %62, %66 : vector<8x4x128xi32>
    %68 = vector.shape_cast %57 : vector<8x128xf32> to vector<8x1x128xf32>
    %c2_i32 = arith.constant 2 : i32
    %69 = vector.broadcast %c2_i32 : i32 to vector<8x4x128xi32>
    %70 = arith.cmpi eq, %62, %69 : vector<8x4x128xi32>
    %71 = vector.shape_cast %59 : vector<8x128xf32> to vector<8x1x128xf32>
    %72 = vector.shape_cast %61 : vector<8x128xf32> to vector<8x1x128xf32>
    %73 = vector.shape_cast %71 : vector<8x1x128xf32> to vector<8x1x128xf32>
    %74 = vector.broadcast %73 : vector<8x1x128xf32> to vector<8x4x128xf32>
    %75 = vector.shape_cast %72 : vector<8x1x128xf32> to vector<8x1x128xf32>
    %76 = vector.broadcast %75 : vector<8x1x128xf32> to vector<8x4x128xf32>
    %77 = arith.select %70, %74, %76 : vector<8x4x128xi1>, vector<8x4x128xf32>
    %78 = vector.shape_cast %68 : vector<8x1x128xf32> to vector<8x1x128xf32>
    %79 = vector.broadcast %78 : vector<8x1x128xf32> to vector<8x4x128xf32>
    %80 = arith.select %67, %79, %77 : vector<8x4x128xi1>, vector<8x4x128xf32>
    %81 = vector.shape_cast %65 : vector<8x1x128xf32> to vector<8x1x128xf32>
    %82 = vector.broadcast %81 : vector<8x1x128xf32> to vector<8x4x128xf32>
    %83 = arith.select %64, %82, %80 : vector<8x4x128xi1>, vector<8x4x128xf32>
    %c0_13 = arith.constant 0 : index
    %c0_14 = arith.constant 0 : index
    %c0_15 = arith.constant 0 : index
    %84 = vector.load %arg4[%c0_13, %c0_14, %c0_15] : memref<8x4x128xf32, #tpu.memory_space<vmem>>, vector<8x4x128xf32>
    tpu.vector_store %arg4[%c0_13, %c0_14, %c0_15], %83 {strides = array<i32>} : memref<8x4x128xf32, #tpu.memory_space<vmem>>, vector<8x4x128xf32>,
    return
  }
  func.func @transform_0(%arg0: i32, %arg1: i32) -> i32 {
    %c0_i32 = arith.constant 0 : i32
    %c0_i32_0 = arith.constant 0 : i32
    return %c0_i32 : i32
  }
  func.func @transform_1(%arg0: i32, %arg1: i32) -> (i32, i32, i32) {
    %c0_i32 = arith.constant 0 : i32
    %c0_i32_0 = arith.constant 0 : i32
    return %c0_i32, %arg0, %arg1 : i32, i32, i32
  }
  func.func @transform_2(%arg0: i32, %arg1: i32) -> (i32, i32, i32) {
    %c0_i32 = arith.constant 0 : i32
    %c0_i32_0 = arith.constant 0 : i32
    return %arg0, %c0_i32, %arg1 : i32, i32, i32
  }
}

</mosaic_0001>

<llo_original>
// kernel: tpu_custom_call.1
$region0: #{tpu_custom_call.1}
  #allocation0 [shape = 'u32[]', space=smem, size = 0x4, offset = 0x4, fixed_abs, tag = 'smem constant byte address 0x4 - core index']
  #allocation1 [shape = 'u32[144,128]{1,0:T(1,128)}', space=vmem, size = 0x12000, scoped, tag = 'internal scratch']
  #allocation2 [shape = 'f32[1]{0:T(128)S(6)}', space=smem, size = 0x200, scoped, tag = 'scoped memory for tpu_custom_call.1']
  %s0 = inlined_call_operand.<no memory space> [shape: f32[1], index: 0, kind: input, shape index: {}]
  %s1 = inlined_call_operand.hbm [shape: f32[6,8,128], index: 1, kind: input, shape index: {}]
  %s2 = inlined_call_operand.hbm [shape: f32[8,4,128], index: 2, kind: output, shape index: {}]
  %s3 = sld [smem:[#allocation0]]
  $region22: #{tpu_custom_call.1} parent=0
    _
  %s5 = ssub.s32 1, %s3
  %s6 = scalar_select 0, %s5, %s3
  %7 = sst [smem:[#allocation2]] %s0
  $region1: #{tpu_custom_call.1} parent=0
    #allocation3 [shape = 'u8[24576]{0}', space=vmem, size = 0x6000, scoped, tag = 'input window, operand 1, single buffered']
    #allocation4 [shape = 's32[1]{0}', space=sflag, size = 0x4, scoped, tag = 'scoped memory for tpu_custom_call.1']
    #allocation5 [shape = 's32[1]{0}', space=sflag, size = 0x4, scoped, tag = 'scoped memory for tpu_custom_call.1']
    #allocation6 [shape = 'u8[16384]{0}', space=vmem, size = 0x4000, scoped, tag = 'output window, operand 0, single buffered']
    %8 = vsyncpa [#allocation4], 0
    %9 = vsyncpa [#allocation5], 0
    // Predicated region
    $region2: #{tpu_custom_call.1} parent=1 // pred_check
      _
    $region3: #{tpu_custom_call.1} parent=1 // pred_check_branch
      %11 = sbr.rel (0) target = $region5
    $region4: #{tpu_custom_call.1} parent=1 // pred_region
      _
    $region5: #{tpu_custom_call.1} parent=1 // pred_fallthru
      _
    // Predicated region
    $region6: #{tpu_custom_call.1} parent=1 // pred_check
      _
    $region7: #{tpu_custom_call.1} parent=1 // pred_check_branch
      %13 = sbr.rel (0) target = $region9
    $region8: #{tpu_custom_call.1} parent=1 // pred_region
      %s15 = ssub.s32 768, 768
      %16 = vsyncadd [#allocation4], %s15
      %s17 = sshll.u32 [#allocation3], 4
      %s18 = int_to_ptr.vmem [resolvable:$true] %s17
      %23 = dma.hbm_to_vmem [thread:$0]  %s1, 768, %s18, [#allocation4], 128, 128, 8
    $region9: #{tpu_custom_call.1} parent=1 // pred_fallthru
      _
    // Predicated region
    $region10: #{tpu_custom_call.1} parent=1 // pred_check
      _
    $region11: #{tpu_custom_call.1} parent=1 // pred_check_branch
      %25 = sbr.rel (0) target = $region13
    $region12: #{tpu_custom_call.1} parent=1 // pred_region
      %26 = dma.done [#allocation4], 768
    $region13: #{tpu_custom_call.1} parent=1 // pred_fallthru
      _
    %v27 = vld [vmem:[#allocation3] sm:$0xff]
    %s28 = scalar_lea.vmem [#allocation3], 8
    %v29 = vld [vmem:[%s28] sm:$0xff]
    %s30 = scalar_lea.vmem [#allocation3], 16
    %v31 = vld [vmem:[%s30] sm:$0xff]
    %s32 = scalar_lea.vmem [#allocation3], 24
    %v33 = vld [vmem:[%s32] sm:$0xff]
    %s34 = scalar_lea.vmem [#allocation3], 32
    %v35 = vld [vmem:[%s34] sm:$0xff]
    %s36 = scalar_lea.vmem [#allocation3], 40
    %v37 = vld [vmem:[%s36] sm:$0xff]
    %s38 = sld [smem:[#allocation2]]
    %v39 = vstv %s38
    %v40 = vmul.f32 %v27, %v39
    %v41 = vmul.f32 %v29, %v39
    %v42 = vmul.f32 %v31, %v39
    %v43 = vmul.f32 %v33, %v39
    %v44 = vmul.f32 %v35, %v39
    %v45 = vmul.f32 %v37, %v39
    %v46 = vmax.f32 %v40, %v41
    %v47 = vmax.f32 %v46, %v42
    %v48 = vmax.f32 %v47, %v43
    %v49 = vmax.f32 %v48, %v44
    %v50 = vmax.f32 %v49, %v45
    %v51 = vsub.f32 %v40, %v50
    %v52 = vmul.f32 %v51, 1.442695
    %v53 = vpow.pop %v52
    %v54 = vsub.f32 %v41, %v50
    %v55 = vmul.f32 %v54, 1.442695
    %v56 = vpow.pop %v55
    %v57 = vsub.f32 %v42, %v50
    %v58 = vmul.f32 %v57, 1.442695
    %v59 = vpow.pop %v58
    %v60 = vsub.f32 %v43, %v50
    %v61 = vmul.f32 %v60, 1.442695
    %v62 = vpow.pop %v61
    %v63 = vsub.f32 %v44, %v50
    %v64 = vmul.f32 %v63, 1.442695
    %v65 = vpow.pop %v64
    %v66 = vsub.f32 %v45, %v50
    %v67 = vmul.f32 %v66, 1.442695
    %v68 = vpow.pop %v67
    %v69 = vadd.f32 %v53, %v56
    %v70 = vadd.f32 %v69, %v59
    %v71 = vadd.f32 %v70, %v62
    %v72 = vadd.f32 %v71, %v65
    %v73 = vadd.f32 %v72, %v68
    %v74 = vrcp.pop %v73
    %v75 = vmul.f32 %v53, %v74
    %v76 = vmul.f32 %v56, %v74
    %v77 = vmul.f32 %v59, %v74
    %v78 = vmul.f32 %v62, %v74
    %v79 = vmul.f32 %v65, %v74
    %v80 = vmul.f32 %v68, %v74
    %v81 = vadd.f32 %v75, %v76
    %v82 = vadd.f32 %v81, %v77
    %v83 = vadd.f32 %v75, %v78
    %v84 = vadd.f32 %v83, %v79
    %v85 = vadd.f32 %v76, %v78
    %v86 = vadd.f32 %v85, %v80
    %v87 = vadd.f32 %v77, %v79
    %v88 = vadd.f32 %v87, %v80
    %v89 = vlaneseq
    %v90 = vshrl.u32 %v89, 7
    %vm91 = vcmp.eq.s32.totalorder %v90, 0
    %v93 = vcombine.high %v82, %v82
    %v95 = vunpack.c.l.s4 1966171168
    %v96 = vunpack.c.0.s8 %v95
    %v97 = vlaneseq
    %v98 = vshrl.u32 %v97, 7
    %v99 = vsub.s32 %v96, %v98
    %v100 = vrot.slane %v82, %v99
    %v102 = vunpack.c.l.s4 1966171168
    %v103 = vunpack.c.0.s8 %v102
    %v104 = vlaneseq
    %v105 = vshrl.u32 %v104, 7
    %v106 = vsub.s32 %v103, %v105
    %v107 = vrot.slane %v93, %v106
    %v108 = vcombine.high %v100, %v100
    %v109 = vcombine.high %v107, %v107
    %v111 = vunpack.c.l.s4 1966171168
    %v112 = vunpack.c.0.s8 %v111
    %v113 = vlaneseq
    %v114 = vshrl.u32 %v113, 7
    %v115 = vsub.s32 %v112, %v114
    %v116 = vrot.slane %v100, %v115
    %v118 = vunpack.c.l.s4 1966171168
    %v119 = vunpack.c.0.s8 %v118
    %v120 = vlaneseq
    %v121 = vshrl.u32 %v120, 7
    %v122 = vsub.s32 %v119, %v121
    %v123 = vrot.slane %v107, %v122
    %v125 = vunpack.c.l.s4 1966171168
    %v126 = vunpack.c.0.s8 %v125
    %v127 = vlaneseq
    %v128 = vshrl.u32 %v127, 7
    %v129 = vsub.s32 %v126, %v128
    %v130 = vrot.slane %v108, %v129
    %v132 = vunpack.c.l.s4 1966171168
    %v133 = vunpack.c.0.s8 %v132
    %v134 = vlaneseq
    %v135 = vshrl.u32 %v134, 7
    %v136 = vsub.s32 %v133, %v135
    %v137 = vrot.slane %v109, %v136
    %v138 = vcombine.high %v116, %v116
    %v139 = vcombine.high %v123, %v123
    %v140 = vcombine.high %v130, %v130
    %v141 = vcombine.high %v137, %v137
    %vm142 = vcmp.eq.s32.totalorder %v90, 1
    %v144 = vcombine.high %v84, %v84
    %v146 = vunpack.c.l.s4 1966171168
    %v147 = vunpack.c.0.s8 %v146
    %v148 = vlaneseq
    %v149 = vshrl.u32 %v148, 7
    %v150 = vsub.s32 %v147, %v149
    %v151 = vrot.slane %v84, %v150
    %v153 = vunpack.c.l.s4 1966171168
    %v154 = vunpack.c.0.s8 %v153
    %v155 = vlaneseq
    %v156 = vshrl.u32 %v155, 7
    %v157 = vsub.s32 %v154, %v156
    %v158 = vrot.slane %v144, %v157
    %v159 = vcombine.high %v151, %v151
    %v160 = vcombine.high %v158, %v158
    %v162 = vunpack.c.l.s4 1966171168
    %v163 = vunpack.c.0.s8 %v162
    %v164 = vlaneseq
    %v165 = vshrl.u32 %v164, 7
    %v166 = vsub.s32 %v163, %v165
    %v167 = vrot.slane %v151, %v166
    %v169 = vunpack.c.l.s4 1966171168
    %v170 = vunpack.c.0.s8 %v169
    %v171 = vlaneseq
    %v172 = vshrl.u32 %v171, 7
    %v173 = vsub.s32 %v170, %v172
    %v174 = vrot.slane %v158, %v173
    %v176 = vunpack.c.l.s4 1966171168
    %v177 = vunpack.c.0.s8 %v176
    %v178 = vlaneseq
    %v179 = vshrl.u32 %v178, 7
    %v180 = vsub.s32 %v177, %v179
    %v181 = vrot.slane %v159, %v180
    %v183 = vunpack.c.l.s4 1966171168
    %v184 = vunpack.c.0.s8 %v183
    %v185 = vlaneseq
    %v186 = vshrl.u32 %v185, 7
    %v187 = vsub.s32 %v184, %v186
    %v188 = vrot.slane %v160, %v187
    %v189 = vcombine.high %v167, %v167
    %v190 = vcombine.high %v174, %v174
    %v191 = vcombine.high %v181, %v181
    %v192 = vcombine.high %v188, %v188
    %vm193 = vcmp.eq.s32.totalorder %v90, 2
    %v195 = vcombine.high %v86, %v86
    %v197 = vunpack.c.l.s4 1966171168
    %v198 = vunpack.c.0.s8 %v197
    %v199 = vlaneseq
    %v200 = vshrl.u32 %v199, 7
    %v201 = vsub.s32 %v198, %v200
    %v202 = vrot.slane %v86, %v201
    %v204 = vunpack.c.l.s4 1966171168
    %v205 = vunpack.c.0.s8 %v204
    %v206 = vlaneseq
    %v207 = vshrl.u32 %v206, 7
    %v208 = vsub.s32 %v205, %v207
    %v209 = vrot.slane %v195, %v208
    %v210 = vcombine.high %v202, %v202
    %v211 = vcombine.high %v209, %v209
    %v213 = vunpack.c.l.s4 1966171168
    %v214 = vunpack.c.0.s8 %v213
    %v215 = vlaneseq
    %v216 = vshrl.u32 %v215, 7
    %v217 = vsub.s32 %v214, %v216
    %v218 = vrot.slane %v202, %v217
    %v220 = vunpack.c.l.s4 1966171168
    %v221 = vunpack.c.0.s8 %v220
    %v222 = vlaneseq
    %v223 = vshrl.u32 %v222, 7
    %v224 = vsub.s32 %v221, %v223
    %v225 = vrot.slane %v209, %v224
    %v227 = vunpack.c.l.s4 1966171168
    %v228 = vunpack.c.0.s8 %v227
    %v229 = vlaneseq
    %v230 = vshrl.u32 %v229, 7
    %v231 = vsub.s32 %v228, %v230
    %v232 = vrot.slane %v210, %v231
    %v234 = vunpack.c.l.s4 1966171168
    %v235 = vunpack.c.0.s8 %v234
    %v236 = vlaneseq
    %v237 = vshrl.u32 %v236, 7
    %v238 = vsub.s32 %v235, %v237
    %v239 = vrot.slane %v211, %v238
    %v240 = vcombine.high %v218, %v218
    %v241 = vcombine.high %v225, %v225
    %v242 = vcombine.high %v232, %v232
    %v243 = vcombine.high %v239, %v239
    %v245 = vcombine.high %v88, %v88
    %v247 = vunpack.c.l.s4 1966171168
    %v248 = vunpack.c.0.s8 %v247
    %v249 = vlaneseq
    %v250 = vshrl.u32 %v249, 7
    %v251 = vsub.s32 %v248, %v250
    %v252 = vrot.slane %v88, %v251
    %v254 = vunpack.c.l.s4 1966171168
    %v255 = vunpack.c.0.s8 %v254
    %v256 = vlaneseq
    %v257 = vshrl.u32 %v256, 7
    %v258 = vsub.s32 %v255, %v257
    %v259 = vrot.slane %v245, %v258
    %v260 = vcombine.high %v252, %v252
    %v261 = vcombine.high %v259, %v259
    %v263 = vunpack.c.l.s4 1966171168
    %v264 = vunpack.c.0.s8 %v263
    %v265 = vlaneseq
    %v266 = vshrl.u32 %v265, 7
    %v267 = vsub.s32 %v264, %v266
    %v268 = vrot.slane %v252, %v267
    %v270 = vunpack.c.l.s4 1966171168
    %v271 = vunpack.c.0.s8 %v270
    %v272 = vlaneseq
    %v273 = vshrl.u32 %v272, 7
    %v274 = vsub.s32 %v271, %v273
    %v275 = vrot.slane %v259, %v274
    %v277 = vunpack.c.l.s4 1966171168
    %v278 = vunpack.c.0.s8 %v277
    %v279 = vlaneseq
    %v280 = vshrl.u32 %v279, 7
    %v281 = vsub.s32 %v278, %v280
    %v282 = vrot.slane %v260, %v281
    %v284 = vunpack.c.l.s4 1966171168
    %v285 = vunpack.c.0.s8 %v284
    %v286 = vlaneseq
    %v287 = vshrl.u32 %v286, 7
    %v288 = vsub.s32 %v285, %v287
    %v289 = vrot.slane %v261, %v288
    %v290 = vcombine.high %v268, %v268
    %v291 = vcombine.high %v275, %v275
    %v292 = vcombine.high %v282, %v282
    %v293 = vcombine.high %v289, %v289
    %v294 = vlaneseq
    %v295 = vshrl.u32 %v294, 7
    %v296 = vsub.s32 0, %v295
    %v297 = vrot.slane %v218, %v296
    %v298 = vlaneseq
    %v299 = vshrl.u32 %v298, 7
    %v300 = vsub.s32 0, %v299
    %v301 = vrot.slane %v232, %v300
    %v302 = vlaneseq
    %v303 = vshrl.u32 %v302, 7
    %v304 = vsub.s32 0, %v303
    %v305 = vrot.slane %v240, %v304
    %v306 = vlaneseq
    %v307 = vshrl.u32 %v306, 7
    %v308 = vsub.s32 0, %v307
    %v309 = vrot.slane %v242, %v308
    %v310 = vlaneseq
    %v311 = vshrl.u32 %v310, 7
    %v312 = vsub.s32 0, %v311
    %v313 = vrot.slane %v225, %v312
    %v314 = vlaneseq
    %v315 = vshrl.u32 %v314, 7
    %v316 = vsub.s32 0, %v315
    %v317 = vrot.slane %v239, %v316
    %v318 = vlaneseq
    %v319 = vshrl.u32 %v318, 7
    %v320 = vsub.s32 0, %v319
    %v321 = vrot.slane %v241, %v320
    %v322 = vlaneseq
    %v323 = vshrl.u32 %v322, 7
    %v324 = vsub.s32 0, %v323
    %v325 = vrot.slane %v243, %v324
    %v334 = vlaneseq
    %v335 = vshrl.u32 %v334, 7
    %v336 = vsub.s32 0, %v335
    %v337 = vrot.slane %v268, %v336
    %v338 = vlaneseq
    %v339 = vshrl.u32 %v338, 7
    %v340 = vsub.s32 0, %v339
    %v341 = vrot.slane %v282, %v340
    %v342 = vlaneseq
    %v343 = vshrl.u32 %v342, 7
    %v344 = vsub.s32 0, %v343
    %v345 = vrot.slane %v290, %v344
    %v346 = vlaneseq
    %v347 = vshrl.u32 %v346, 7
    %v348 = vsub.s32 0, %v347
    %v349 = vrot.slane %v292, %v348
    %v350 = vlaneseq
    %v351 = vshrl.u32 %v350, 7
    %v352 = vsub.s32 0, %v351
    %v353 = vrot.slane %v275, %v352
    %v354 = vlaneseq
    %v355 = vshrl.u32 %v354, 7
    %v356 = vsub.s32 0, %v355
    %v357 = vrot.slane %v289, %v356
    %v358 = vlaneseq
    %v359 = vshrl.u32 %v358, 7
    %v360 = vsub.s32 0, %v359
    %v361 = vrot.slane %v291, %v360
    %v362 = vlaneseq
    %v363 = vshrl.u32 %v362, 7
    %v364 = vsub.s32 0, %v363
    %v365 = vrot.slane %v293, %v364
    %v374 = vsel %vm193, %v297, %v337
    %v375 = vsel %vm193, %v301, %v341
    %v376 = vsel %vm193, %v305, %v345
    %v377 = vsel %vm193, %v309, %v349
    %v378 = vsel %vm193, %v313, %v353
    %v379 = vsel %vm193, %v317, %v357
    %v380 = vsel %vm193, %v321, %v361
    %v381 = vsel %vm193, %v325, %v365
    %v382 = vlaneseq
    %v383 = vshrl.u32 %v382, 7
    %v384 = vsub.s32 0, %v383
    %v385 = vrot.slane %v167, %v384
    %v386 = vlaneseq
    %v387 = vshrl.u32 %v386, 7
    %v388 = vsub.s32 0, %v387
    %v389 = vrot.slane %v181, %v388
    %v390 = vlaneseq
    %v391 = vshrl.u32 %v390, 7
    %v392 = vsub.s32 0, %v391
    %v393 = vrot.slane %v189, %v392
    %v394 = vlaneseq
    %v395 = vshrl.u32 %v394, 7
    %v396 = vsub.s32 0, %v395
    %v397 = vrot.slane %v191, %v396
    %v398 = vlaneseq
    %v399 = vshrl.u32 %v398, 7
    %v400 = vsub.s32 0, %v399
    %v401 = vrot.slane %v174, %v400
    %v402 = vlaneseq
    %v403 = vshrl.u32 %v402, 7
    %v404 = vsub.s32 0, %v403
    %v405 = vrot.slane %v188, %v404
    %v406 = vlaneseq
    %v407 = vshrl.u32 %v406, 7
    %v408 = vsub.s32 0, %v407
    %v409 = vrot.slane %v190, %v408
    %v410 = vlaneseq
    %v411 = vshrl.u32 %v410, 7
    %v412 = vsub.s32 0, %v411
    %v413 = vrot.slane %v192, %v412
    %v422 = vsel %vm142, %v385, %v374
    %v423 = vsel %vm142, %v389, %v375
    %v424 = vsel %vm142, %v393, %v376
    %v425 = vsel %vm142, %v397, %v377
    %v426 = vsel %vm142, %v401, %v378
    %v427 = vsel %vm142, %v405, %v379
    %v428 = vsel %vm142, %v409, %v380
    %v429 = vsel %vm142, %v413, %v381
    %v430 = vlaneseq
    %v431 = vshrl.u32 %v430, 7
    %v432 = vsub.s32 0, %v431
    %v433 = vrot.slane %v116, %v432
    %v434 = vlaneseq
    %v435 = vshrl.u32 %v434, 7
    %v436 = vsub.s32 0, %v435
    %v437 = vrot.slane %v130, %v436
    %v438 = vlaneseq
    %v439 = vshrl.u32 %v438, 7
    %v440 = vsub.s32 0, %v439
    %v441 = vrot.slane %v138, %v440
    %v442 = vlaneseq
    %v443 = vshrl.u32 %v442, 7
    %v444 = vsub.s32 0, %v443
    %v445 = vrot.slane %v140, %v444
    %v446 = vlaneseq
    %v447 = vshrl.u32 %v446, 7
    %v448 = vsub.s32 0, %v447
    %v449 = vrot.slane %v123, %v448
    %v450 = vlaneseq
    %v451 = vshrl.u32 %v450, 7
    %v452 = vsub.s32 0, %v451
    %v453 = vrot.slane %v137, %v452
    %v454 = vlaneseq
    %v455 = vshrl.u32 %v454, 7
    %v456 = vsub.s32 0, %v455
    %v457 = vrot.slane %v139, %v456
    %v458 = vlaneseq
    %v459 = vshrl.u32 %v458, 7
    %v460 = vsub.s32 0, %v459
    %v461 = vrot.slane %v141, %v460
    %v470 = vsel %vm91, %v433, %v422
    %v471 = vsel %vm91, %v437, %v423
    %v472 = vsel %vm91, %v441, %v424
    %v473 = vsel %vm91, %v445, %v425
    %v474 = vsel %vm91, %v449, %v426
    %v475 = vsel %vm91, %v453, %v427
    %v476 = vsel %vm91, %v457, %v428
    %v477 = vsel %vm91, %v461, %v429
    %478 = vst [vmem:[#allocation6] sm:$0xf] %v470
    %479 = vst [vmem:[#allocation6 + $0x4] sm:$0xf] %v471
    %480 = vst [vmem:[#allocation6 + $0x8] sm:$0xf] %v472
    %481 = vst [vmem:[#allocation6 + $0xc] sm:$0xf] %v473
    %482 = vst [vmem:[#allocation6 + $0x10] sm:$0xf] %v474
    %483 = vst [vmem:[#allocation6 + $0x14] sm:$0xf] %v475
    %484 = vst [vmem:[#allocation6 + $0x18] sm:$0xf] %v476
    %485 = vst [vmem:[#allocation6 + $0x1c] sm:$0xf] %v477
    // Predicated region
    $region14: #{tpu_custom_call.1} parent=1 // pred_check
      _
    $region15: #{tpu_custom_call.1} parent=1 // pred_check_branch
      %487 = sbr.rel (0) target = $region17
    $region16: #{tpu_custom_call.1} parent=1 // pred_region
      %s489 = ssub.s32 512, 512
      %490 = vsyncadd [#allocation5], %s489
      %s491 = sshll.u32 [#allocation6], 4
      %s492 = int_to_ptr.vmem [resolvable:$true] %s491
      %497 = dma.vmem_to_hbm [thread:$0]  %s492, 512, %s2, [#allocation5], 64, 64, 4
    $region17: #{tpu_custom_call.1} parent=1 // pred_fallthru
      _
    // Predicated region
    $region18: #{tpu_custom_call.1} parent=1 // pred_check
      _
    $region19: #{tpu_custom_call.1} parent=1 // pred_check_branch
      %499 = sbr.rel (0) target = $region21
    $region20: #{tpu_custom_call.1} parent=1 // pred_region
      %500 = dma.done [#allocation5], 512
    $region21: #{tpu_custom_call.1} parent=1 // pred_fallthru
      _
    %501 = vsyncpa [#allocation4], 1
    %502 = vsyncpa [#allocation5], 1

</llo_original>
